<compile_context>
chip_gen: v7x
topology: tpu7x:2x2x1
jax: 0.10.0
libtpu: 0.0.40
codegen_flags: <defaults>
</compile_context>

<pallas_src>
import jax
import jax.numpy as jnp
import numpy as np
from jax.experimental import pallas as pl
from jax.experimental.pallas import tpu as pltpu

# ---------------- small config consistent with the module ----------------
B = 2                 # batch
L = 8                 # seq_in  (== 'inp' of weights_pool, required by einsum 'bnki,nkio')
D_MODEL = 16          # d_model == vocab_size == N
N = D_MODEL
EXPAND = 2
D_INNER = EXPAND * D_MODEL
D_CONV = 3
EMBED = 8
CHEB_K = 3
OUT = 4
EPS = 1e-5
BL = B * L
LOG2_L = L.bit_length() - 1
assert (1 << LOG2_L) == L

# ---------------- packed weight-slab layout (one lane-dense f32 block) ----------------
SLAB_W = 2 * D_INNER                      # 64 lanes
R_WIN = 0                                 # rows [0, 16): in_proj weight (D_MODEL, 2*D_INNER)
R_W3 = R_WIN + D_MODEL                    # rows [16, 48): fused graph/out_proj weight (D_INNER, OUT*L)
R_RMSW = R_W3 + D_INNER                   # row 48: RMSNorm weight (D_MODEL,)
R_CONVW = R_RMSW + 1                      # rows 49..51: conv taps (D_CONV, D_INNER)
R_CONVB = R_CONVW + D_CONV                # row 52: conv bias (D_INNER,)
R_C = R_CONVB + 1                         # row 53: fused output bias (OUT,)
SLAB_ROWS = ((R_C + 1 + 7) // 8) * 8      # 56


# ============================ fused data-path kernel ============================
def samba_kernel(x_ref, w_ref, o_ref):
    f32 = jnp.float32

    # ---- unpack the packed weight slab (static slices) ----
    win   = w_ref[R_WIN:R_WIN + D_MODEL, :]                   # (D_MODEL, 2*D_INNER)
    w3    = w_ref[R_W3:R_W3 + D_INNER, 0:OUT * L]             # (D_INNER, OUT*L)
    rmsw  = w_ref[R_RMSW:R_RMSW + 1, 0:D_MODEL]               # (1, D_MODEL)
    convb = w_ref[R_CONVB:R_CONVB + 1, 0:D_INNER]             # (1, D_INNER)
    cbias = w_ref[R_C:R_C + 1, 0:OUT]                         # (1, OUT)

    # ---- RMSNorm ----
    x = x_ref[...]                                            # (BL, D_MODEL)
    ms = jnp.mean(x * x, axis=-1, keepdims=True)
    xn = x * jax.lax.rsqrt(ms + EPS) * rmsw

    # ---- in_proj (default MXU precision) ----
    xr = jnp.dot(xn, win, preferred_element_type=f32)         # (BL, 2*D_INNER)
    xp = xr[:, :D_INNER]
    res = xr[:, D_INNER:]

    # ---- causal depthwise conv: sublane roll + per-position mask ----
    pos = jax.lax.broadcasted_iota(jnp.int32, (BL, 1), 0) & (L - 1)   # position within sequence
    y = xp * w_ref[R_CONVW + D_CONV - 1:R_CONVW + D_CONV, 0:D_INNER]
    for s in range(1, D_CONV):
        tap = w_ref[R_CONVW + D_CONV - 1 - s:R_CONVW + D_CONV - s, 0:D_INNER]
        rolled = pltpu.roll(xp, shift=s, axis=0)              # row r <- row r-s (mod BL)
        valid = (pos >= s).astype(f32)                        # kills wrap-around + cross-sequence rows
        y = y + rolled * valid * tap
    y = y + convb

    # ---- SiLU gate + fused (out_proj o Chebyshev graph conv o node proj) ----
    g = y * (res * jax.nn.sigmoid(res))                       # (BL, D_INNER)
    z = jnp.dot(g, w3, preferred_element_type=f32)            # (BL, OUT*L)

    # ---- masked block-diagonal reduction:  out[b, o] = sum_i z[b*L+i, o*L+i] ----
    rr = jax.lax.broadcasted_iota(jnp.int32, (BL, OUT * L), 0)
    cc = jax.lax.broadcasted_iota(jnp.int32, (BL, OUT * L), 1)
    zm = z * ((rr & (L - 1)) == (cc & (L - 1))).astype(f32)
    cr = jax.lax.broadcasted_iota(jnp.int32, (OUT * L, OUT), 0)
    co = jax.lax.broadcasted_iota(jnp.int32, (OUT * L, OUT), 1)
    sel = (jax.lax.shift_right_logical(cr, jnp.int32(LOG2_L)) == co).astype(f32)
    p = jnp.dot(zm, sel, preferred_element_type=f32)          # (BL, OUT)
    for b in range(B):
        o_ref[b:b + 1, :] = (jnp.sum(p[b * L:(b + 1) * L, :], axis=0, keepdims=True)
                             + cbias)


# ============================ host-side pre-contraction ============================
def pack_params(p):
    """Pre-contract all parameter-only math (Gaussian graph, Chebyshev supports,
    adaptive weight pool, node projection, bias) and pack every per-forward weight
    into one lane-dense f32 slab."""
    HP = jax.lax.Precision.HIGHEST          # off the critical path; keep exact
    adj = p["adj"]
    sq = jnp.sum(adj * adj, axis=-1, keepdims=True)
    dist = sq + sq.T - 2.0 * jnp.dot(adj, adj.T, precision=HP)
    A = jnp.exp(-p["gamma"][0, 0] * dist)
    ADJ = jax.nn.softmax(A, axis=1)
    sups = [jnp.eye(N, dtype=jnp.float32), ADJ]
    for _ in range(2, CHEB_K):
        sups.append(2.0 * jnp.dot(ADJ, sups[-1], precision=HP) - sups[-2])
    supports = jnp.stack(sups, axis=0)                                     # (K, N, N)
    weights = jnp.einsum("nd,dkio->nkio", adj, p["wpool"], precision=HP)   # (N, K, L, OUT)
    bias = jnp.dot(adj, p["bpool"], precision=HP)                          # (N, OUT)
    pw = p["projw"][:, 0]                                                  # (N,)
    # W2[m, o, i] = sum_{n,k} projw[n] * weights[n,k,i,o] * supports[k,n,m]
    w2 = jnp.einsum("n,nkio,knm->moi", pw, weights, supports, precision=HP)
    w2 = w2.reshape(N, OUT * L)
    w3 = jnp.dot(p["wout"], w2, precision=HP)                              # (D_INNER, OUT*L)
    c = jnp.dot(pw, bias, precision=HP)[None, :] + p["projb"][0, 0]        # (1, OUT)

    slab = jnp.zeros((SLAB_ROWS, SLAB_W), jnp.float32)
    slab = slab.at[R_WIN:R_WIN + D_MODEL, :].set(p["win"])
    slab = slab.at[R_W3:R_W3 + D_INNER, 0:OUT * L].set(w3)
    slab = slab.at[R_RMSW, 0:D_MODEL].set(p["rmsw"][0])
    slab = slab.at[R_CONVW:R_CONVW + D_CONV, 0:D_INNER].set(p["convw"])
    slab = slab.at[R_CONVB, 0:D_INNER].set(p["convb"][0])
    slab = slab.at[R_C, 0:OUT].set(c[0])
    return slab


def samba_forward(x, slab):
    vmem = pl.BlockSpec(memory_space=pltpu.MemorySpace.VMEM)
    out = pl.pallas_call(
        samba_kernel,
        out_shape=jax.ShapeDtypeStruct((B, OUT), jnp.float32),
        in_specs=[vmem, vmem],
        out_specs=vmem,
    )(x.reshape(B * L, D_MODEL), slab)
    return out[:, :, None]                                    # (B, OUT, 1)


# ============================ pure-JAX reference ============================
def samba_ref(x, p):
    HP = jax.lax.Precision.HIGHEST
    ms = jnp.mean(x * x, axis=-1, keepdims=True)
    xn = x * jax.lax.rsqrt(ms + EPS) * p["rmsw"]
    xr = jnp.matmul(xn, p["win"], precision=HP)
    xp, res = xr[..., :D_INNER], xr[..., D_INNER:]
    y = xp * p["convw"][D_CONV - 1]
    for s in range(1, D_CONV):
        shifted = jnp.pad(xp, ((0, 0), (s, 0), (0, 0)))[:, :L, :]
        y = y + shifted * p["convw"][D_CONV - 1 - s]
    y = y + p["convb"]
    xx = jnp.matmul(y * (res * jax.nn.sigmoid(res)), p["wout"], precision=HP)   # (B, L, N)

    adj = p["adj"]
    sq = jnp.sum(adj * adj, axis=-1, keepdims=True)
    dist = sq + sq.T - 2.0 * jnp.matmul(adj, adj.T, precision=HP)
    A = jnp.exp(-p["gamma"][0, 0] * dist)
    ADJ = jax.nn.softmax(A, axis=1)
    sups = [jnp.eye(N, dtype=jnp.float32), ADJ]
    for _ in range(2, CHEB_K):
        sups.append(2.0 * jnp.matmul(ADJ, sups[-1], precision=HP) - sups[-2])
    supports = jnp.stack(sups, axis=0)                                      # (K, N, N)

    weights = jnp.einsum("nd,dkio->nkio", adj, p["wpool"], precision=HP)    # (N, K, L, OUT)
    bias = jnp.matmul(adj, p["bpool"], precision=HP)                        # (N, OUT)
    x_g = jnp.einsum("knm,bmc->bknc", supports, xx.transpose(0, 2, 1), precision=HP)
    x_g = x_g.transpose(0, 2, 1, 3)                                         # (B, N, K, L)
    out = jnp.einsum("bnki,nkio->bno", x_g, weights, precision=HP) + bias   # (B, N, OUT)
    fin = jnp.matmul(out.transpose(0, 2, 1), p["projw"], precision=HP) + p["projb"][0, 0]
    return fin                                                              # (B, OUT, 1)


# ================================ params =================================
def init_params(key):
    ks = jax.random.split(key, 10)
    s = 0.1
    rmsw = jnp.ones((1, D_MODEL), jnp.float32)
    win = s * jax.random.normal(ks[0], (D_MODEL, 2 * D_INNER), jnp.float32)  # in_proj.weight.T
    convw = s * jax.random.normal(ks[1], (D_CONV, D_INNER), jnp.float32)     # conv1d.weight[:,0,:].T
    convb = s * jax.random.normal(ks[2], (1, D_INNER), jnp.float32)
    wout = s * jax.random.normal(ks[3], (D_INNER, D_MODEL), jnp.float32)     # out_proj.weight.T
    adj = jax.random.normal(ks[4], (N, EMBED), jnp.float32)
    gamma = jnp.ones((1, 1), jnp.float32)
    wpool = s * jax.random.normal(ks[5], (EMBED, CHEB_K, L, OUT), jnp.float32)
    bpool = s * jax.random.normal(ks[6], (EMBED, OUT), jnp.float32)
    projw = s * jax.random.normal(ks[7], (N, 1), jnp.float32)                # proj.weight.T
    projb = s * jax.random.normal(ks[8], (1, 1), jnp.float32)
    return dict(rmsw=rmsw, win=win, convw=convw, convb=convb, wout=wout,
                adj=adj, gamma=gamma, wpool=wpool, bpool=bpool,
                projw=projw, projb=projb)


if __name__ == "__main__":
    key = jax.random.PRNGKey(0)
    k_in, k_par = jax.random.split(key)
    x = jax.random.normal(k_in, (B, L, D_MODEL), jnp.float32)
    params = init_params(k_par)

    slab = jax.block_until_ready(pack_params(params))          # one-time, param-only

    y = jax.block_until_ready(samba_forward(x, slab))
    assert y.shape == (B, OUT, 1), y.shape

    y_ref = jax.block_until_ready(samba_ref(x, params))
    if not np.allclose(np.asarray(y), np.asarray(y_ref), rtol=1e-2, atol=1e-2):
        raise AssertionError("Pallas kernel output does not match JAX reference")

    print("KERNEL_OK")
</pallas_src>

<mosaic_0001>
module attributes {stable_mosaic.version = 11 : i64} {
  func.func @samba_kernel(%arg0: memref<16x16xf32, #tpu.memory_space<vmem>>, %arg1: memref<56x64xf32, #tpu.memory_space<vmem>>, %arg2: memref<2x4xf32, #tpu.memory_space<vmem>>) attributes {dimension_semantics = [], scalar_prefetch = 0 : i64, scratch_operands = 0 : i64, tpu.core_type = #tpu.core_type<tc>} {
    %c0 = arith.constant 0 : index
    %c0_0 = arith.constant 0 : index
    %0 = vector.load %arg1[%c0, %c0_0] : memref<56x64xf32, #tpu.memory_space<vmem>>, vector<16x64xf32>
    %c16 = arith.constant 16 : index
    %c0_1 = arith.constant 0 : index
    %1 = vector.load %arg1[%c16, %c0_1] : memref<56x64xf32, #tpu.memory_space<vmem>>, vector<32x32xf32>
    %c48 = arith.constant 48 : index
    %c0_2 = arith.constant 0 : index
    %2 = vector.load %arg1[%c48, %c0_2] : memref<56x64xf32, #tpu.memory_space<vmem>>, vector<1x16xf32>
    %c52 = arith.constant 52 : index
    %c0_3 = arith.constant 0 : index
    %3 = vector.load %arg1[%c52, %c0_3] : memref<56x64xf32, #tpu.memory_space<vmem>>, vector<1x32xf32>
    %c53 = arith.constant 53 : index
    %c0_4 = arith.constant 0 : index
    %4 = vector.load %arg1[%c53, %c0_4] : memref<56x64xf32, #tpu.memory_space<vmem>>, vector<1x4xf32>
    %c0_5 = arith.constant 0 : index
    %c0_6 = arith.constant 0 : index
    %5 = vector.load %arg0[%c0_5, %c0_6] : memref<16x16xf32, #tpu.memory_space<vmem>>, vector<16x16xf32>
    %6 = arith.mulf %5, %5 : vector<16x16xf32>
    %cst = arith.constant dense<0.000000e+00> : vector<16xf32>
    %7 = vector.multi_reduction <add>, %6, %cst [1] : vector<16x16xf32> to vector<16xf32>
    %8 = vector.shape_cast %7 : vector<16xf32> to vector<16x1xf32>
    %cst_7 = arith.constant 1.600000e+01 : f32
    %9 = vector.broadcast %cst_7 : f32 to vector<16x1xf32>
    %10 = arith.divf %8, %9 : vector<16x1xf32>
    %cst_8 = arith.constant 9.99999974E-6 : f32
    %11 = vector.broadcast %cst_8 : f32 to vector<16x1xf32>
    %12 = arith.addf %10, %11 : vector<16x1xf32>
    %13 = math.rsqrt %12 : vector<16x1xf32>
    %14 = vector.broadcast %13 : vector<16x1xf32> to vector<16x16xf32>
    %15 = arith.mulf %5, %14 : vector<16x16xf32>
    %16 = vector.broadcast %2 : vector<1x16xf32> to vector<16x16xf32>
    %17 = arith.mulf %15, %16 : vector<16x16xf32>
    %cst_9 = arith.constant dense<0.000000e+00> : vector<16x64xf32>
    %18 = tpu.matmul %17, %0, %cst_9 {dimension_numbers = #tpu.dot_dimension_numbers<[1], [0], [0], [1], [0, 0, 1, 1], [], []>} : vector<16x16xf32>, vector<16x64xf32>, vector<16x64xf32> -> vector<16x64xf32>
    %19 = vector.extract_strided_slice %18 {offsets = [0, 0], sizes = [16, 32], strides = [1, 1]} : vector<16x64xf32> to vector<16x32xf32>
    %20 = vector.extract_strided_slice %18 {offsets = [0, 32], sizes = [16, 32], strides = [1, 1]} : vector<16x64xf32> to vector<16x32xf32>
    %21 = tpu.iota {dimensions = array<i32: 0>} : vector<16x1xi32>
    %c7_i32 = arith.constant 7 : i32
    %22 = vector.broadcast %c7_i32 : i32 to vector<16x1xi32>
    %23 = arith.andi %21, %22 : vector<16x1xi32>
    %c51 = arith.constant 51 : index
    %c0_10 = arith.constant 0 : index
    %24 = vector.load %arg1[%c51, %c0_10] : memref<56x64xf32, #tpu.memory_space<vmem>>, vector<1x32xf32>
    %25 = vector.broadcast %24 : vector<1x32xf32> to vector<16x32xf32>
    %26 = arith.mulf %19, %25 : vector<16x32xf32>
    %c50 = arith.constant 50 : index
    %c0_11 = arith.constant 0 : index
    %27 = vector.load %arg1[%c50, %c0_11] : memref<56x64xf32, #tpu.memory_space<vmem>>, vector<1x32xf32>
    %c1_i32 = arith.constant 1 : i32
    %28 = tpu.dynamic_rotate %19 by %c1_i32 dim 0 : vector<16x32xf32>, i32 -> vector<16x32xf32>
    %c1_i32_12 = arith.constant 1 : i32
    %29 = vector.broadcast %c1_i32_12 : i32 to vector<16x1xi32>
    %30 = arith.cmpi sge, %23, %29 : vector<16x1xi32>
    %31 = arith.extui %30 : vector<16x1xi1> to vector<16x1xi32>
    %32 = arith.sitofp %31 : vector<16x1xi32> to vector<16x1xf32>
    %33 = vector.broadcast %32 : vector<16x1xf32> to vector<16x32xf32>
    %34 = arith.mulf %28, %33 : vector<16x32xf32>
    %35 = vector.broadcast %27 : vector<1x32xf32> to vector<16x32xf32>
    %36 = arith.mulf %34, %35 : vector<16x32xf32>
    %37 = arith.addf %26, %36 : vector<16x32xf32>
    %c49 = arith.constant 49 : index
    %c0_13 = arith.constant 0 : index
    %38 = vector.load %arg1[%c49, %c0_13] : memref<56x64xf32, #tpu.memory_space<vmem>>, vector<1x32xf32>
    %c2_i32 = arith.constant 2 : i32
    %39 = tpu.dynamic_rotate %19 by %c2_i32 dim 0 : vector<16x32xf32>, i32 -> vector<16x32xf32>
    %c2_i32_14 = arith.constant 2 : i32
    %40 = vector.broadcast %c2_i32_14 : i32 to vector<16x1xi32>
    %41 = arith.cmpi sge, %23, %40 : vector<16x1xi32>
    %42 = arith.extui %41 : vector<16x1xi1> to vector<16x1xi32>
    %43 = arith.sitofp %42 : vector<16x1xi32> to vector<16x1xf32>
    %44 = vector.broadcast %43 : vector<16x1xf32> to vector<16x32xf32>
    %45 = arith.mulf %39, %44 : vector<16x32xf32>
    %46 = vector.broadcast %38 : vector<1x32xf32> to vector<16x32xf32>
    %47 = arith.mulf %45, %46 : vector<16x32xf32>
    %48 = arith.addf %37, %47 : vector<16x32xf32>
    %49 = vector.broadcast %3 : vector<1x32xf32> to vector<16x32xf32>
    %50 = arith.addf %48, %49 : vector<16x32xf32>
    %51 = arith.negf %20 : vector<16x32xf32>
    %52 = math.exp %51 : vector<16x32xf32>
    %cst_15 = arith.constant 1.000000e+00 : f32
    %53 = vector.broadcast %cst_15 : f32 to vector<16x32xf32>
    %54 = arith.addf %53, %52 : vector<16x32xf32>
    %55 = arith.divf %53, %54 : vector<16x32xf32>
    %56 = arith.mulf %20, %55 : vector<16x32xf32>
    %57 = arith.mulf %50, %56 : vector<16x32xf32>
    %cst_16 = arith.constant dense<0.000000e+00> : vector<16x32xf32>
    %58 = tpu.matmul %57, %1, %cst_16 {dimension_numbers = #tpu.dot_dimension_numbers<[1], [0], [0], [1], [0, 0, 1, 1], [], []>} : vector<16x32xf32>, vector<32x32xf32>, vector<16x32xf32> -> vector<16x32xf32>
    %59 = tpu.iota {dimensions = array<i32: 0>} : vector<16x32xi32>
    %60 = tpu.iota {dimensions = array<i32: 1>} : vector<16x32xi32>
    %c7_i32_17 = arith.constant 7 : i32
    %61 = vector.broadcast %c7_i32_17 : i32 to vector<16x32xi32>
    %62 = arith.andi %59, %61 : vector<16x32xi32>
    %c7_i32_18 = arith.constant 7 : i32
    %63 = vector.broadcast %c7_i32_18 : i32 to vector<16x32xi32>
    %64 = arith.andi %60, %63 : vector<16x32xi32>
    %65 = arith.cmpi eq, %62, %64 : vector<16x32xi32>
    %66 = arith.extui %65 : vector<16x32xi1> to vector<16x32xi32>
    %67 = arith.sitofp %66 : vector<16x32xi32> to vector<16x32xf32>
    %68 = arith.mulf %58, %67 : vector<16x32xf32>
    %69 = tpu.iota {dimensions = array<i32: 0>} : vector<32x4xi32>
    %70 = tpu.iota {dimensions = array<i32: 1>} : vector<32x4xi32>
    %c3_i32 = arith.constant 3 : i32
    %71 = vector.broadcast %c3_i32 : i32 to vector<32x4xi32>
    %72 = arith.shrui %69, %71 : vector<32x4xi32>
    %73 = arith.cmpi eq, %72, %70 : vector<32x4xi32>
    %74 = arith.extui %73 : vector<32x4xi1> to vector<32x4xi32>
    %75 = arith.sitofp %74 : vector<32x4xi32> to vector<32x4xf32>
    %cst_19 = arith.constant dense<0.000000e+00> : vector<16x4xf32>
    %76 = tpu.matmul %68, %75, %cst_19 {dimension_numbers = #tpu.dot_dimension_numbers<[1], [0], [0], [1], [0, 0, 1, 1], [], []>} : vector<16x32xf32>, vector<32x4xf32>, vector<16x4xf32> -> vector<16x4xf32>
    %77 = vector.extract_strided_slice %76 {offsets = [0, 0], sizes = [8, 4], strides = [1, 1]} : vector<16x4xf32> to vector<8x4xf32>
    %cst_20 = arith.constant dense<0.000000e+00> : vector<4xf32>
    %78 = vector.multi_reduction <add>, %77, %cst_20 [0] : vector<8x4xf32> to vector<4xf32>
    %79 = vector.shape_cast %78 : vector<4xf32> to vector<1x4xf32>
    %80 = arith.addf %79, %4 : vector<1x4xf32>
    %c0_21 = arith.constant 0 : index
    %c0_22 = arith.constant 0 : index
    %81 = vector.load %arg2[%c0_21, %c0_22] : memref<2x4xf32, #tpu.memory_space<vmem>>, vector<1x4xf32>
    tpu.vector_store %arg2[%c0_21, %c0_22], %80 {strides = array<i32>} : memref<2x4xf32, #tpu.memory_space<vmem>>, vector<1x4xf32>,
    %82 = vector.extract_strided_slice %76 {offsets = [8, 0], sizes = [8, 4], strides = [1, 1]} : vector<16x4xf32> to vector<8x4xf32>
    %cst_23 = arith.constant dense<0.000000e+00> : vector<4xf32>
    %83 = vector.multi_reduction <add>, %82, %cst_23 [0] : vector<8x4xf32> to vector<4xf32>
    %84 = vector.shape_cast %83 : vector<4xf32> to vector<1x4xf32>
    %85 = arith.addf %84, %4 : vector<1x4xf32>
    %c1 = arith.constant 1 : index
    %c0_24 = arith.constant 0 : index
    %86 = vector.load %arg2[%c1, %c0_24] : memref<2x4xf32, #tpu.memory_space<vmem>>, vector<1x4xf32>
    tpu.vector_store %arg2[%c1, %c0_24], %85 {strides = array<i32>} : memref<2x4xf32, #tpu.memory_space<vmem>>, vector<1x4xf32>,
    return
  }
}

</mosaic_0001>

<llo_original>
// kernel: tpu_custom_call.1
$region0: #{tpu_custom_call.1}
  #allocation0 [shape = 'u32[]', space=smem, size = 0x4, offset = 0x4, fixed_abs, tag = 'smem constant byte address 0x4 - core index']
  #allocation1 [shape = 'u32[144,128]{1,0:T(1,128)}', space=vmem, size = 0x12000, scoped, tag = 'internal scratch']
  %s0 = inlined_call_operand.hbm [shape: f32[16,16], index: 0, kind: input, shape index: {}]
  %s1 = inlined_call_operand.hbm [shape: f32[56,64], index: 1, kind: input, shape index: {}]
  %s2 = inlined_call_operand.hbm [shape: f32[2,4], index: 2, kind: output, shape index: {}]
  %s3 = sld [smem:[#allocation0]]
  $region26: #{tpu_custom_call.1} parent=0
    _
  %s5 = ssub.s32 1, %s3
  %s6 = scalar_select 0, %s5, %s3
  $region1: #{tpu_custom_call.1} parent=0
    #allocation2 [shape = 'u8[8192]{0}', space=vmem, size = 0x2000, scoped, tag = 'input window, operand 0, single buffered']
    #allocation3 [shape = 's32[1]{0}', space=sflag, size = 0x4, scoped, tag = 'scoped memory for tpu_custom_call.1']
    #allocation4 [shape = 's32[1]{0}', space=sflag, size = 0x4, scoped, tag = 'scoped memory for tpu_custom_call.1']
    #allocation5 [shape = 'u8[28672]{0}', space=vmem, size = 0x7000, scoped, tag = 'input window, operand 1, single buffered']
    #allocation6 [shape = 's32[1]{0}', space=sflag, size = 0x4, scoped, tag = 'scoped memory for tpu_custom_call.1']
    #allocation7 [shape = 'u8[1024]{0}', space=vmem, size = 0x400, scoped, tag = 'output window, operand 0, single buffered']
    %7 = vsyncpa [#allocation3], 0
    %8 = vsyncpa [#allocation6], 0
    %9 = vsyncpa [#allocation4], 0
    // Predicated region
    $region2: #{tpu_custom_call.1} parent=1 // pred_check
      _
    $region3: #{tpu_custom_call.1} parent=1 // pred_check_branch
      %11 = sbr.rel (0) target = $region5
    $region4: #{tpu_custom_call.1} parent=1 // pred_region
      %s13 = ssub.s32 256, 256
      %14 = vsyncadd [#allocation3], %s13
      %s15 = sshll.u32 [#allocation2], 4
      %s16 = int_to_ptr.vmem [resolvable:$true] %s15
      %21 = dma.hbm_to_vmem [thread:$0]  %s0, 256, %s16, [#allocation3], 128, 128, 8
    $region5: #{tpu_custom_call.1} parent=1 // pred_fallthru
      _
    // Predicated region
    $region6: #{tpu_custom_call.1} parent=1 // pred_check
      _
    $region7: #{tpu_custom_call.1} parent=1 // pred_check_branch
      %23 = sbr.rel (0) target = $region9
    $region8: #{tpu_custom_call.1} parent=1 // pred_region
      %s25 = ssub.s32 896, 896
      %26 = vsyncadd [#allocation6], %s25
      %s27 = sshll.u32 [#allocation5], 4
      %s28 = int_to_ptr.vmem [resolvable:$true] %s27
      %33 = dma.hbm_to_vmem [thread:$0]  %s1, 896, %s28, [#allocation6], 128, 128, 8
    $region9: #{tpu_custom_call.1} parent=1 // pred_fallthru
      _
    // Predicated region
    $region10: #{tpu_custom_call.1} parent=1 // pred_check
      _
    $region11: #{tpu_custom_call.1} parent=1 // pred_check_branch
      %35 = sbr.rel (0) target = $region13
    $region12: #{tpu_custom_call.1} parent=1 // pred_region
      %36 = dma.done [#allocation3], 256
    $region13: #{tpu_custom_call.1} parent=1 // pred_fallthru
      _
    // Predicated region
    $region14: #{tpu_custom_call.1} parent=1 // pred_check
      _
    $region15: #{tpu_custom_call.1} parent=1 // pred_check_branch
      %38 = sbr.rel (0) target = $region17
    $region16: #{tpu_custom_call.1} parent=1 // pred_region
      %39 = dma.done [#allocation6], 896
    $region17: #{tpu_custom_call.1} parent=1 // pred_fallthru
      _
    %v40 = vld [vmem:[#allocation5] sm:$0xff]
    %v41 = vld [vmem:[#allocation5 + $0x8] sm:$0xff]
    %v42 = vld [vmem:[#allocation5 + $0x10] sm:$0xff]
    %v43 = vld [vmem:[#allocation5 + $0x18] sm:$0xff]
    %v44 = vld [vmem:[#allocation5 + $0x20] sm:$0xff]
    %v45 = vld [vmem:[#allocation5 + $0x28] sm:$0xff]
    %v46 = vld [vmem:[#allocation5 + $0x30] sm:$0x1]
    %v47 = vld [vmem:[#allocation5 + $0x34] sm:$0x1]
    %v48 = vld [vmem:[#allocation5 + $0x35] sm:$0x1]
    %v49 = vld [vmem:[#allocation2] sm:$0xff]
    %v50 = vld [vmem:[#allocation2 + $0x8] sm:$0xff]
    %v51 = vmul.f32 %v49, %v49
    %v52 = vmul.f32 %v50, %v50
    %vm53 = vcmask 130048
    %v54 = vsel %vm53, %v51, 0.0
    %55 = vadd.xlane.f32.xlu0 %v54
    %v56 = vpop.xlane.xlu0 %55
    %v57 = vsel %vm53, %v52, 0.0
    %58 = vadd.xlane.f32.xlu0 %v57
    %v59 = vpop.xlane.xlu0 %58
    %v60 = vrcp.pop 16.0
    %v61 = vmul.f32 %v56, %v60
    %v62 = vmul.f32 %v59, %v60
    %v63 = vadd.f32 %v61, 1e-05
    %v64 = vadd.f32 %v62, 1e-05
    %v65 = vrsqrt.pop %v63
    %v66 = vrsqrt.pop %v64
    %v67 = vmul.f32 %v49, %v65
    %v68 = vmul.f32 %v50, %v66
    %v69 = vlaneseq
    %v70 = vshrl.u32 %v69, 7
    %v71 = vsub.s32 0, %v70
    %v72 = vrot.slane %v46, %v71
    %v73 = vmul.f32 %v67, %v72
    %v74 = vmul.f32 %v68, %v72
    %v76 = vsel %vm53, %v73, 0
    %v79 = vsel %vm53, %v74, 0
    %81 = vmatprep.subr.mxu0 0.0
    %82 = vmatpush1.msra.mxu0 %v40
    %83 = vmatprep.subr.mxu0 0.0
    %84 = vmatpush1.msra.mxu0 %v41
    %85 = vmatprep.subr.mxu0 0.0
    %86 = vmatpush1.msra.mxu0 0.0
    %87 = vmatprep.subr.mxu0 0.0
    %88 = vmatpush1.msra.mxu0 0.0
    %89 = vmatprep.subr.mxu0 0.0
    %90 = vmatpush1.msra.mxu0 0.0
    %91 = vmatprep.subr.mxu0 0.0
    %92 = vmatpush1.msra.mxu0 0.0
    %93 = vmatprep.subr.mxu0 0.0
    %94 = vmatpush1.msra.mxu0 0.0
    %95 = vmatprep.subr.mxu0 0.0
    %96 = vmatpush1.msra.mxu0 0.0
    %97 = vmatprep.subr.mxu0 0.0
    %98 = vmatpush1.msra.mxu0 0.0
    %99 = vmatprep.subr.mxu0 0.0
    %100 = vmatpush1.msra.mxu0 0.0
    %101 = vmatprep.subr.mxu0 0.0
    %102 = vmatpush1.msra.mxu0 0.0
    %103 = vmatprep.subr.mxu0 0.0
    %104 = vmatpush1.msra.mxu0 0.0
    %105 = vmatprep.subr.mxu0 0.0
    %106 = vmatpush1.msra.mxu0 0.0
    %107 = vmatprep.subr.mxu0 0.0
    %108 = vmatpush1.msra.mxu0 0.0
    %109 = vmatprep.subr.mxu0 0.0
    %110 = vmatpush1.msra.mxu0 0.0
    %111 = vmatprep.subr.mxu0 0.0
    %112 = vmatpush1.msra.mxu0 0.0
    %113 = vmatprep.subr.mxu0 0.0
    %114 = vmatpush1.msra.mxu0 0.0
    %115 = vmatprep.subr.mxu0 0.0
    %116 = vmatpush1.msra.mxu0 0.0
    %117 = vmatprep.subr.mxu0 0.0
    %118 = vmatpush1.msra.mxu0 0.0
    %119 = vmatprep.subr.mxu0 0.0
    %120 = vmatpush1.msra.mxu0 0.0
    %121 = vmatprep.subr.mxu0 0.0
    %122 = vmatpush1.msra.mxu0 0.0
    %123 = vmatprep.subr.mxu0 0.0
    %124 = vmatpush1.msra.mxu0 0.0
    %125 = vmatprep.subr.mxu0 0.0
    %126 = vmatpush1.msra.mxu0 0.0
    %127 = vmatprep.subr.mxu0 0.0
    %128 = vmatpush1.msra.mxu0 0.0
    %129 = vmatprep.subr.mxu0 0.0
    %130 = vmatpush1.msra.mxu0 0.0
    %131 = vmatprep.subr.mxu0 0.0
    %132 = vmatpush1.msra.mxu0 0.0
    %133 = vmatprep.subr.mxu0 0.0
    %134 = vmatpush1.msra.mxu0 0.0
    %135 = vmatprep.subr.mxu0 0.0
    %136 = vmatpush1.msra.mxu0 0.0
    %137 = vmatprep.subr.mxu0 0.0
    %138 = vmatpush1.msra.mxu0 0.0
    %139 = vmatprep.subr.mxu0 0.0
    %140 = vmatpush1.msra.mxu0 0.0
    %141 = vmatprep.subr.mxu0 0.0
    %142 = vmatpush1.msra.mxu0 0.0
    %143 = vmatprep.subr.mxu0 0.0
    %144 = vmatpush1.msra.mxu0 0.0
    %145 = vmatprep.mubr.f32.mxu0 0.0
    %146 = vmatmul.mubr.f32.gmra.mrb[0].mxu0 %v76
    %v147 = vpop.f32.mrb[0].mxu0
    %v148 = vadd.f32 0.0, %v147
    %v149 = vpop.f32.mrb[0].mxu0
    %150 = vmatprep.mubr.f32.mxu0 0.0
    %151 = vmatmul.mubr.f32.gmra.mrb[0].mxu0 %v79
    %v152 = vpop.f32.mrb[0].mxu0
    %v153 = vadd.f32 0.0, %v152
    %v154 = vpop.f32.mrb[0].mxu0
    %155 = vdwg.mxu0
    %v156 = vlaneseq
    %v157 = vshrl.u32 %v156, 7
    %v158 = vadd.s32 %v157, 8
    %v159 = vand.u32 %v157, 7
    %v160 = vand.u32 %v158, 7
    %v161 = vld [vmem:[#allocation5 + $0x33] sm:$0x1]
    %v162 = vlaneseq
    %v163 = vshrl.u32 %v162, 7
    %v164 = vsub.s32 0, %v163
    %v165 = vrot.slane %v161, %v164
    %v166 = vmul.f32 %v148, %v165
    %v167 = vmul.f32 %v153, %v165
    %v168 = vld [vmem:[#allocation5 + $0x32] sm:$0x1]
    %v169 = vrot.slane %v148, 7
    %v170 = vrot.slane %v153, 7
    %vm171 = vcmp.lt.s32.totalorder %v157, 1
    %v172 = vsel %vm171, %v169, %v170
    %v173 = vsel %vm171, %v170, %v169
    %vm174 = vcmp.ge.s32.totalorder %v159, 1
    %vm175 = vcmp.ge.s32.totalorder %v160, 1
    %v176 = vsel %vm174, 1, 0
    %v177 = vsel %vm175, 1, 0
    %v178 = vcvt.s32.f32 %v176
    %v179 = vcvt.s32.f32 %v177
    %v180 = vmul.f32 %v173, %v178
    %v181 = vmul.f32 %v172, %v179
    %v182 = vlaneseq
    %v183 = vshrl.u32 %v182, 7
    %v184 = vsub.s32 0, %v183
    %v185 = vrot.slane %v168, %v184
    %v186 = vmul.f32 %v180, %v185
    %v187 = vmul.f32 %v181, %v185
    %v188 = vadd.f32 %v166, %v186
    %v189 = vadd.f32 %v167, %v187
    %v190 = vld [vmem:[#allocation5 + $0x31] sm:$0x1]
    %v191 = vrot.slane %v148, 6
    %v192 = vrot.slane %v153, 6
    %vm193 = vcmp.lt.s32.totalorder %v157, 2
    %v194 = vsel %vm193, %v191, %v192
    %v195 = vsel %vm193, %v192, %v191
    %vm196 = vcmp.ge.s32.totalorder %v159, 2
    %vm197 = vcmp.ge.s32.totalorder %v160, 2
    %v198 = vsel %vm196, 1, 0
    %v199 = vsel %vm197, 1, 0
    %v200 = vcvt.s32.f32 %v198
    %v201 = vcvt.s32.f32 %v199
    %v202 = vmul.f32 %v195, %v200
    %v203 = vmul.f32 %v194, %v201
    %v204 = vlaneseq
    %v205 = vshrl.u32 %v204, 7
    %v206 = vsub.s32 0, %v205
    %v207 = vrot.slane %v190, %v206
    %v208 = vmul.f32 %v202, %v207
    %v209 = vmul.f32 %v203, %v207
    %v210 = vadd.f32 %v188, %v208
    %v211 = vadd.f32 %v189, %v209
    %v212 = vlaneseq
    %v213 = vshrl.u32 %v212, 7
    %v214 = vsub.s32 0, %v213
    %v215 = vrot.slane %v47, %v214
    %v216 = vadd.f32 %v210, %v215
    %v217 = vadd.f32 %v211, %v215
    %v218 = vxor.u32 %v148, 2147483648
    %v219 = vxor.u32 %v153, 2147483648
    %v220 = vmul.f32 %v218, 1.442695
    %v221 = vpow.pop %v220
    %v222 = vmul.f32 %v219, 1.442695
    %v223 = vpow.pop %v222
    %v224 = vadd.f32 %v221, 1.0
    %v225 = vadd.f32 %v223, 1.0
    %v226 = vrcp.pop %v224
    %v227 = vmul.f32 1.0, %v226
    %v228 = vrcp.pop %v225
    %v229 = vmul.f32 1.0, %v228
    %v230 = vmul.f32 %v148, %v227
    %v231 = vmul.f32 %v153, %v229
    %234 = vrot.lane.b32.xlu0 %v230, 96
    %v235 = vpop.permute.xlu0 %234
    %236 = vrot.lane.b32.xlu0 %v231, 96
    %v237 = vpop.permute.xlu0 %236
    %v240 = vmul.f32 %v216, %v235
    %v241 = vmul.f32 %v217, %v237
    %vm242 = vcmask 261120
    %v244 = vsel %vm242, %v240, 0
    %v247 = vsel %vm242, %v241, 0
    %249 = vmatprep.subr.mxu0 0.0
    %250 = vmatpush1.msra.mxu0 %v42
    %251 = vmatprep.subr.mxu0 0.0
    %252 = vmatpush1.msra.mxu0 %v43
    %253 = vmatprep.subr.mxu0 0.0
    %254 = vmatpush1.msra.mxu0 %v44
    %255 = vmatprep.subr.mxu0 0.0
    %256 = vmatpush1.msra.mxu0 %v45
    %257 = vmatprep.subr.mxu0 0.0
    %258 = vmatpush1.msra.mxu0 0.0
    %259 = vmatprep.subr.mxu0 0.0
    %260 = vmatpush1.msra.mxu0 0.0
    %261 = vmatprep.subr.mxu0 0.0
    %262 = vmatpush1.msra.mxu0 0.0
    %263 = vmatprep.subr.mxu0 0.0
    %264 = vmatpush1.msra.mxu0 0.0
    %265 = vmatprep.subr.mxu0 0.0
    %266 = vmatpush1.msra.mxu0 0.0
    %267 = vmatprep.subr.mxu0 0.0
    %268 = vmatpush1.msra.mxu0 0.0
    %269 = vmatprep.subr.mxu0 0.0
    %270 = vmatpush1.msra.mxu0 0.0
    %271 = vmatprep.subr.mxu0 0.0
    %272 = vmatpush1.msra.mxu0 0.0
    %273 = vmatprep.subr.mxu0 0.0
    %274 = vmatpush1.msra.mxu0 0.0
    %275 = vmatprep.subr.mxu0 0.0
    %276 = vmatpush1.msra.mxu0 0.0
    %277 = vmatprep.subr.mxu0 0.0
    %278 = vmatpush1.msra.mxu0 0.0
    %279 = vmatprep.subr.mxu0 0.0
    %280 = vmatpush1.msra.mxu0 0.0
    %281 = vmatprep.subr.mxu0 0.0
    %282 = vmatpush1.msra.mxu0 0.0
    %283 = vmatprep.subr.mxu0 0.0
    %284 = vmatpush1.msra.mxu0 0.0
    %285 = vmatprep.subr.mxu0 0.0
    %286 = vmatpush1.msra.mxu0 0.0
    %287 = vmatprep.subr.mxu0 0.0
    %288 = vmatpush1.msra.mxu0 0.0
    %289 = vmatprep.subr.mxu0 0.0
    %290 = vmatpush1.msra.mxu0 0.0
    %291 = vmatprep.subr.mxu0 0.0
    %292 = vmatpush1.msra.mxu0 0.0
    %293 = vmatprep.subr.mxu0 0.0
    %294 = vmatpush1.msra.mxu0 0.0
    %295 = vmatprep.subr.mxu0 0.0
    %296 = vmatpush1.msra.mxu0 0.0
    %297 = vmatprep.subr.mxu0 0.0
    %298 = vmatpush1.msra.mxu0 0.0
    %299 = vmatprep.subr.mxu0 0.0
    %300 = vmatpush1.msra.mxu0 0.0
    %301 = vmatprep.subr.mxu0 0.0
    %302 = vmatpush1.msra.mxu0 0.0
    %303 = vmatprep.subr.mxu0 0.0
    %304 = vmatpush1.msra.mxu0 0.0
    %305 = vmatprep.subr.mxu0 0.0
    %306 = vmatpush1.msra.mxu0 0.0
    %307 = vmatprep.subr.mxu0 0.0
    %308 = vmatpush1.msra.mxu0 0.0
    %309 = vmatprep.subr.mxu0 0.0
    %310 = vmatpush1.msra.mxu0 0.0
    %311 = vmatprep.subr.mxu0 0.0
    %312 = vmatpush1.msra.mxu0 0.0
    %313 = vmatprep.mubr.f32.mxu0 0.0
    %314 = vmatmul.mubr.f32.gmra.mrb[0].mxu0 %v244
    %v315 = vpop.f32.mrb[0].mxu0
    %v316 = vadd.f32 0.0, %v315
    %v317 = vpop.f32.mrb[0].mxu0
    %318 = vmatprep.mubr.f32.mxu0 0.0
    %319 = vmatmul.mubr.f32.gmra.mrb[0].mxu0 %v247
    %v320 = vpop.f32.mrb[0].mxu0
    %v321 = vadd.f32 0.0, %v320
    %v322 = vpop.f32.mrb[0].mxu0
    %323 = vdwg.mxu0
    %v324 = vlaneseq
    %v325 = vand.u32 %v324, 127
    %v326 = vand.u32 %v325, 7
    %vm327 = vcmp.eq.s32.totalorder %v159, %v326
    %vm328 = vcmp.eq.s32.totalorder %v160, %v326
    %v329 = vsel %vm327, 1, 0
    %v330 = vsel %vm328, 1, 0
    %v331 = vcvt.s32.f32 %v329
    %v332 = vcvt.s32.f32 %v330
    %v333 = vmul.f32 %v316, %v331
    %v334 = vmul.f32 %v321, %v332
    %v335 = vadd.s32 %v157, 16
    %v336 = vadd.s32 %v157, 24
    %v337 = vshrl.u32 %v157, 3
    %v338 = vshrl.u32 %v158, 3
    %v339 = vshrl.u32 %v335, 3
    %v340 = vshrl.u32 %v336, 3
    %vm341 = vcmp.eq.s32.totalorder %v337, %v325
    %vm342 = vcmp.eq.s32.totalorder %v338, %v325
    %vm343 = vcmp.eq.s32.totalorder %v339, %v325
    %vm344 = vcmp.eq.s32.totalorder %v340, %v325
    %v345 = vsel %vm341, 1, 0
    %v346 = vsel %vm342, 1, 0
    %v347 = vsel %vm343, 1, 0
    %v348 = vsel %vm344, 1, 0
    %v349 = vcvt.s32.f32 %v345
    %v350 = vcvt.s32.f32 %v346
    %v351 = vcvt.s32.f32 %v347
    %v352 = vcvt.s32.f32 %v348
    %v354 = vsel %vm242, %v333, 0
    %v357 = vsel %vm242, %v334, 0
    %359 = vmatprep.subr.mxu0 0.0
    %360 = vmatpush1.msra.mxu0 %v349
    %361 = vmatprep.subr.mxu0 0.0
    %362 = vmatpush1.msra.mxu0 %v350
    %363 = vmatprep.subr.mxu0 0.0
    %364 = vmatpush1.msra.mxu0 %v351
    %365 = vmatprep.subr.mxu0 0.0
    %366 = vmatpush1.msra.mxu0 %v352
    %367 = vmatprep.subr.mxu0 0.0
    %368 = vmatpush1.msra.mxu0 0.0
    %369 = vmatprep.subr.mxu0 0.0
    %370 = vmatpush1.msra.mxu0 0.0
    %371 = vmatprep.subr.mxu0 0.0
    %372 = vmatpush1.msra.mxu0 0.0
    %373 = vmatprep.subr.mxu0 0.0
    %374 = vmatpush1.msra.mxu0 0.0
    %375 = vmatprep.subr.mxu0 0.0
    %376 = vmatpush1.msra.mxu0 0.0
    %377 = vmatprep.subr.mxu0 0.0
    %378 = vmatpush1.msra.mxu0 0.0
    %379 = vmatprep.subr.mxu0 0.0
    %380 = vmatpush1.msra.mxu0 0.0
    %381 = vmatprep.subr.mxu0 0.0
    %382 = vmatpush1.msra.mxu0 0.0
    %383 = vmatprep.subr.mxu0 0.0
    %384 = vmatpush1.msra.mxu0 0.0
    %385 = vmatprep.subr.mxu0 0.0
    %386 = vmatpush1.msra.mxu0 0.0
    %387 = vmatprep.subr.mxu0 0.0
    %388 = vmatpush1.msra.mxu0 0.0
    %389 = vmatprep.subr.mxu0 0.0
    %390 = vmatpush1.msra.mxu0 0.0
    %391 = vmatprep.subr.mxu0 0.0
    %392 = vmatpush1.msra.mxu0 0.0
    %393 = vmatprep.subr.mxu0 0.0
    %394 = vmatpush1.msra.mxu0 0.0
    %395 = vmatprep.subr.mxu0 0.0
    %396 = vmatpush1.msra.mxu0 0.0
    %397 = vmatprep.subr.mxu0 0.0
    %398 = vmatpush1.msra.mxu0 0.0
    %399 = vmatprep.subr.mxu0 0.0
    %400 = vmatpush1.msra.mxu0 0.0
    %401 = vmatprep.subr.mxu0 0.0
    %402 = vmatpush1.msra.mxu0 0.0
    %403 = vmatprep.subr.mxu0 0.0
    %404 = vmatpush1.msra.mxu0 0.0
    %405 = vmatprep.subr.mxu0 0.0
    %406 = vmatpush1.msra.mxu0 0.0
    %407 = vmatprep.subr.mxu0 0.0
    %408 = vmatpush1.msra.mxu0 0.0
    %409 = vmatprep.subr.mxu0 0.0
    %410 = vmatpush1.msra.mxu0 0.0
    %411 = vmatprep.subr.mxu0 0.0
    %412 = vmatpush1.msra.mxu0 0.0
    %413 = vmatprep.subr.mxu0 0.0
    %414 = vmatpush1.msra.mxu0 0.0
    %415 = vmatprep.subr.mxu0 0.0
    %416 = vmatpush1.msra.mxu0 0.0
    %417 = vmatprep.subr.mxu0 0.0
    %418 = vmatpush1.msra.mxu0 0.0
    %419 = vmatprep.subr.mxu0 0.0
    %420 = vmatpush1.msra.mxu0 0.0
    %421 = vmatprep.subr.mxu0 0.0
    %422 = vmatpush1.msra.mxu0 0.0
    %423 = vmatprep.mubr.f32.mxu0 0.0
    %424 = vmatmul.mubr.f32.gmra.mrb[0].mxu0 %v354
    %v425 = vpop.f32.mrb[0].mxu0
    %v426 = vadd.f32 0.0, %v425
    %v427 = vpop.f32.mrb[0].mxu0
    %428 = vmatprep.mubr.f32.mxu0 0.0
    %429 = vmatmul.mubr.f32.gmra.mrb[0].mxu0 %v357
    %v430 = vpop.f32.mrb[0].mxu0
    %v431 = vadd.f32 0.0, %v430
    %v432 = vpop.f32.mrb[0].mxu0
    %433 = vdwg.mxu0
    %vm434 = vcmask 31744
    %v435 = vsel %vm434, %v426, 0.0
    %v436 = vrot.slane %v435, 4
    %v437 = vadd.f32 %v435, %v436
    %v438 = vrot.slane %v437, 2
    %v439 = vadd.f32 %v437, %v438
    %v440 = vrot.slane %v439, 1
    %v441 = vadd.f32 %v439, %v440
    %v442 = vadd.f32 %v441, %v48
    %vm443 = vcmask 24576
    %444 = vst.msk [vmem:[#allocation7] sm:$0x1] %vm443, %v442
    %v445 = vsel %vm434, %v431, 0.0
    %v446 = vrot.slane %v445, 4
    %v447 = vadd.f32 %v445, %v446
    %v448 = vrot.slane %v447, 2
    %v449 = vadd.f32 %v447, %v448
    %v450 = vrot.slane %v449, 1
    %v451 = vadd.f32 %v449, %v450
    %v452 = vadd.f32 %v451, %v48
    %453 = vst.msk [vmem:[#allocation7 + $0x1] sm:$0x1] %vm443, %v452
    // Predicated region
    $region18: #{tpu_custom_call.1} parent=1 // pred_check
      _
    $region19: #{tpu_custom_call.1} parent=1 // pred_check_branch
      %455 = sbr.rel (0) target = $region21
    $region20: #{tpu_custom_call.1} parent=1 // pred_region
      %s457 = ssub.s32 32, 32
      %458 = vsyncadd [#allocation4], %s457
      %s460 = sshll.u32 [#allocation7], 4
      %s461 = int_to_ptr.vmem [resolvable:$true] %s460
      %463 = dma.vmem_to_hbm [thread:$0]  %s461, 32, %s2, [#allocation4]
    $region21: #{tpu_custom_call.1} parent=1 // pred_fallthru
      _
    // Predicated region
    $region22: #{tpu_custom_call.1} parent=1 // pred_check
      _
    $region23: #{tpu_custom_call.1} parent=1 // pred_check_branch
      %465 = sbr.rel (0) target = $region25
    $region24: #{tpu_custom_call.1} parent=1 // pred_region
      %466 = dma.done [#allocation4], 32
    $region25: #{tpu_custom_call.1} parent=1 // pred_fallthru
      _
    %467 = vsyncpa [#allocation3], 1
    %468 = vsyncpa [#allocation6], 1
    %469 = vsyncpa [#allocation4], 1

</llo_original>
